<compile_context>
chip_gen: v7x
topology: tpu7x:2x2x1
jax: 0.10.0
libtpu: 0.0.40
codegen_flags: <defaults>
</compile_context>

<pallas_src>
import functools
import math

import jax
import jax.numpy as jnp
from jax import lax
from jax.experimental import pallas as pl
from jax.experimental.pallas import tpu as pltpu

_LOG_CLAMP = math.log(1e-8)   # clamp(min=1e-8) applied in the log domain
_NEG_BIG = -1e30              # finite "minus infinity" (avoids inf-inf NaNs)


def _gen_loss_kernel(x_ref,       # VMEM (TN, F)  f32   pred_data tile (native layout)
                     w1_ref,      # VMEM (H, F)   bf16  G_w1^T
                     b1_ref,      # VMEM (H, 1)   f32   G_b1
                     w2_ref,      # VMEM (H, 1)   f32   G_w2 / temperature
                     b2_ref,      # VMEM (1, 1)   f32   G_b2 / temperature
                     idx_ref,     # VMEM (S, 1)   i32   sample_index
                     reward_ref,  # VMEM (S, 1)   f32   reward
                     is_ref,      # VMEM (S, 1)   f32   important_sampling
                     out_ref,     # VMEM (1, 1)   f32   loss
                     m_sc,        # VMEM (1, 1)   f32   running max
                     l_sc,        # VMEM (1, 1)   f32   running sum(exp)
                     g_sc,        # VMEM (S, 1)   f32   gathered scores
                     *, n_total, block_n, need_mask):
    i = pl.program_id(0)
    n_tiles = pl.num_programs(0)
    S = g_sc.shape[0]

    @pl.when(i == 0)
    def _():
        m_sc[...] = jnp.full_like(m_sc, _NEG_BIG)
        l_sc[...] = jnp.zeros_like(l_sc)
        g_sc[...] = jnp.zeros_like(g_sc)

    # --- h^T = tanh(W1^T @ X^T + b1): [H, TN] ------------------------------
    # X stays in its native [TN, F] layout; contract the F axes of both
    # operands (NT matmul) so no wrapper-side HBM transpose is needed.
    # bf16 MXU feed with f32 accumulation; the cast happens here, in VMEM.
    x_bf = x_ref[...].astype(jnp.bfloat16)                           # [TN, F]
    h = jnp.tanh(
        lax.dot_general(w1_ref[...], x_bf,
                        dimension_numbers=(((1,), (1,)), ((), ())),
                        preferred_element_type=jnp.float32)
        + b1_ref[...])                                               # [H, TN]

    # --- score row [1, TN]: VPU multiply + sublane reduce (no width-1 MXU) --
    # 1/temperature is already folded into w2/b2 by the wrapper.
    score = (jnp.sum(h * w2_ref[...], axis=0, keepdims=True)
             + b2_ref[...])                                          # [1, TN]

    if need_mask:
        # Partial last tile: lanes >= N hold garbage (Pallas pads the block
        # read).  Clamp them to a finite "minus infinity" once and use the
        # masked value everywhere below (logsumexp AND gather).
        lane = lax.broadcasted_iota(jnp.int32, (1, block_n), 1) + i * block_n
        score = jnp.where(lane < n_total, score, _NEG_BIG)

    # --- streaming logsumexp across the N grid (lane reductions) ------------
    m_old = m_sc[...]                                                # [1, 1]
    m_new = jnp.maximum(m_old, jnp.max(score, axis=-1, keepdims=True))
    # Note: exp(m_old - m_new) underflows to exactly 0.0 on the first tile
    # (m_old = -1e30).  This is intentional — do NOT replace -1e30 with -inf
    # (inf - inf = NaN) or with a smaller magnitude that fails to underflow.
    l_sc[...] = (l_sc[...] * jnp.exp(m_old - m_new)
                 + jnp.sum(jnp.exp(score - m_new), axis=-1, keepdims=True))
    m_sc[...] = m_new

    # --- gather score[sample_index]: lane-dense compare + lane reduce -------
    # Exactly one tile matches each index, so summing across tiles is exact.
    col = lax.broadcasted_iota(jnp.int32, (S, block_n), 1) + i * block_n
    match = col == idx_ref[...]                                      # [S, TN]
    g_sc[...] += jnp.sum(jnp.where(match, score, 0.0),
                         axis=-1, keepdims=True)                     # [S, 1]

    # --- finalize: log p = score - lse, clamp, weighted mean ----------------
    @pl.when(i == n_tiles - 1)
    def _():
        lse = m_sc[...] + jnp.log(l_sc[...])                         # [1, 1]
        log_p = jnp.maximum(g_sc[...] - lse, _LOG_CLAMP)             # [S, 1]
        terms = log_p * reward_ref[...] * is_ref[...]                # [S, 1]
        out_ref[...] = -(jnp.sum(terms, axis=0, keepdims=True)
                         / jnp.float32(S))                           # [1, 1]


def gen_forward(pred_data, sample_index, reward, important_sampling,
                G_w1, G_w2, G_b1, G_b2, temperature, *, block_n=None):
    """Pallas implementation of GEN.forward. Returns a scalar loss (f32)."""
    N, F = pred_data.shape
    H = G_w1.shape[1]
    S = sample_index.shape[0]

    if block_n is None:
        # Large N tiles amortize the ~0.35 us per-grid-step overhead.  At
        # small F even a 2048-wide f32 tile (double-buffered) plus the f32
        # intermediates is well under the scoped-VMEM limit on v5e/v6e/v7x.
        block_n = min(128 * pl.cdiv(N, 128), 2048)
    grid_n = pl.cdiv(N, block_n)
    need_mask = (N % block_n) != 0

    # Native-layout pred_data (read once by the kernel; bf16 cast is in-kernel).
    x = pred_data.astype(jnp.float32)                                  # [N, F]
    # Tiny weights: lane-major W1^T in bf16; 1/temperature folded into w2/b2.
    w1_t = jnp.transpose(G_w1.astype(jnp.float32)).astype(jnp.bfloat16)  # [H, F]
    b1 = G_b1.reshape(H, 1).astype(jnp.float32)
    inv_t = jnp.float32(1.0 / float(temperature))
    w2 = G_w2.reshape(H, 1).astype(jnp.float32) * inv_t
    b2 = G_b2.reshape(1, 1).astype(jnp.float32) * inv_t
    idx = sample_index.reshape(S, 1).astype(jnp.int32)
    rew = reward.reshape(S, 1).astype(jnp.float32)
    imp = important_sampling.reshape(S, 1).astype(jnp.float32)

    kernel = functools.partial(_gen_loss_kernel, n_total=N, block_n=block_n,
                               need_mask=need_mask)

    out = pl.pallas_call(
        kernel,
        out_shape=jax.ShapeDtypeStruct((1, 1), jnp.float32),
        grid_spec=pltpu.PrefetchScalarGridSpec(
            num_scalar_prefetch=0,
            grid=(grid_n,),
            in_specs=[
                pl.BlockSpec((block_n, F), lambda i: (i, 0)),   # X tile (native)
                pl.BlockSpec((H, F), lambda i: (0, 0)),         # W1^T
                pl.BlockSpec((H, 1), lambda i: (0, 0)),         # b1
                pl.BlockSpec((H, 1), lambda i: (0, 0)),         # w2 / temp
                pl.BlockSpec((1, 1), lambda i: (0, 0)),         # b2 / temp
                pl.BlockSpec((S, 1), lambda i: (0, 0)),         # sample_index
                pl.BlockSpec((S, 1), lambda i: (0, 0)),         # reward
                pl.BlockSpec((S, 1), lambda i: (0, 0)),         # importance
            ],
            out_specs=pl.BlockSpec((1, 1), lambda i: (0, 0)),
            scratch_shapes=[
                pltpu.VMEM((1, 1), jnp.float32),   # running max
                pltpu.VMEM((1, 1), jnp.float32),   # running sum(exp)
                pltpu.VMEM((S, 1), jnp.float32),   # gathered scores
            ],
        ),
        compiler_params=pltpu.CompilerParams(
            dimension_semantics=("arbitrary",),     # softmax reduction axis
            vmem_limit_bytes=32 * 1024 * 1024,      # safe on v5e/v6e/v7x
        ),
    )(x, w1_t, b1, w2, b2, idx, rew, imp)
    return out[0, 0]


def gen_forward_ref(pred_data, sample_index, reward, important_sampling,
                    G_w1, G_w2, G_b1, G_b2, temperature):
    """Pure-JAX reference mirroring the PyTorch forward (f32)."""
    score = (jnp.dot(jnp.tanh(jnp.dot(pred_data, G_w1) + G_b1), G_w2)
             + G_b2) / temperature
    softmax_score = jax.nn.softmax(score.reshape(-1))
    gan_prob = jnp.clip(softmax_score[sample_index], 1e-8, None)
    return -jnp.mean(jnp.log(gan_prob) * reward.reshape(-1)
                     * important_sampling.reshape(-1))


if __name__ == "__main__":
    # N candidate docs, F features, H hidden units, S sampled docs.
    N, F, H, S = 512, 32, 32, 8
    temperature = 0.2

    key = jax.random.PRNGKey(0)
    k_pred, k_w1, k_w2, k_b1, k_b2, k_idx, k_rew, k_is = jax.random.split(key, 8)

    pred_data = jax.random.normal(k_pred, (N, F), dtype=jnp.float32)
    G_w1 = 0.1 * jax.random.normal(k_w1, (F, H), dtype=jnp.float32)
    G_w2 = 0.1 * jax.random.normal(k_w2, (H, 1), dtype=jnp.float32)
    G_b1 = 0.01 * jax.random.normal(k_b1, (H,), dtype=jnp.float32)
    G_b2 = 0.01 * jax.random.normal(k_b2, (1,), dtype=jnp.float32)

    sample_index = jax.random.randint(k_idx, (S,), 0, N, dtype=jnp.int32)
    reward = jax.random.normal(k_rew, (S,), dtype=jnp.float32)
    important_sampling = jax.random.uniform(
        k_is, (S,), dtype=jnp.float32, minval=0.5, maxval=1.5)

    loss = gen_forward(pred_data, sample_index, reward, important_sampling,
                       G_w1, G_w2, G_b1, G_b2, temperature)
    loss = jax.block_until_ready(loss)

    # Reference 1: exact PyTorch-style f32 forward (loose tol: the kernel feeds
    # bf16 inputs to the MXU, so inputs are quantized to ~0.4% relative).
    loss_ref = jax.block_until_ready(
        gen_forward_ref(pred_data, sample_index, reward, important_sampling,
                        G_w1, G_w2, G_b1, G_b2, temperature))

    # Reference 2: same forward with the inputs pre-quantized to bf16, which is
    # the computation the kernel actually performs (tight tol).
    pred_bf = pred_data.astype(jnp.bfloat16).astype(jnp.float32)
    w1_bf = G_w1.astype(jnp.bfloat16).astype(jnp.float32)
    loss_ref_bf = jax.block_until_ready(
        gen_forward_ref(pred_bf, sample_index, reward, important_sampling,
                        w1_bf, G_w2, G_b1, G_b2, temperature))

    assert jnp.isfinite(loss), f"non-finite loss: {loss}"
    assert jnp.allclose(loss, loss_ref_bf, rtol=5e-3, atol=5e-4), (
        f"mismatch vs bf16-input ref: pallas={loss} ref={loss_ref_bf}")
    assert jnp.allclose(loss, loss_ref, rtol=2e-2, atol=2e-3), (
        f"mismatch vs f32 ref: pallas={loss} ref={loss_ref}")

    # Also exercise the multi-tile + partial-last-tile path (grid_n > 1, mask on).
    loss_tiled = jax.block_until_ready(
        gen_forward(pred_data[:500], sample_index % 500, reward,
                    important_sampling, G_w1, G_w2, G_b1, G_b2, temperature,
                    block_n=128))
    loss_tiled_ref = jax.block_until_ready(
        gen_forward_ref(pred_bf[:500], sample_index % 500, reward,
                        important_sampling, w1_bf, G_w2, G_b1, G_b2,
                        temperature))
    assert jnp.allclose(loss_tiled, loss_tiled_ref, rtol=5e-3, atol=5e-4), (
        f"mismatch (tiled/masked): pallas={loss_tiled} ref={loss_tiled_ref}")

    print("KERNEL_OK")
</pallas_src>

<mosaic_0001>
module attributes {stable_mosaic.version = 11 : i64} {
  func.func @_gen_loss_kernel(%arg0: i32, %arg1: memref<512x32xf32, #tpu.memory_space<vmem>>, %arg2: memref<32x32xbf16, #tpu.memory_space<vmem>>, %arg3: memref<32x1xf32, #tpu.memory_space<vmem>>, %arg4: memref<32x1xf32, #tpu.memory_space<vmem>>, %arg5: memref<1x1xf32, #tpu.memory_space<vmem>>, %arg6: memref<8x1xi32, #tpu.memory_space<vmem>>, %arg7: memref<8x1xf32, #tpu.memory_space<vmem>>, %arg8: memref<8x1xf32, #tpu.memory_space<vmem>>, %arg9: memref<1x1xf32, #tpu.memory_space<vmem>>, %arg10: memref<1x1xf32, #tpu.memory_space<vmem>>, %arg11: memref<1x1xf32, #tpu.memory_space<vmem>>, %arg12: memref<8x1xf32, #tpu.memory_space<vmem>>) attributes {dimension_semantics = [#tpu.dimension_semantics<arbitrary>], iteration_bounds = array<i64: 1>, scalar_prefetch = 0 : i64, scratch_operands = 3 : i64, tpu.core_type = #tpu.core_type<tc>, window_params = [{transform_indices = @transform_0, window_bounds = array<i64: 512, 32>}, {pipeline_mode = #tpu.pipeline_mode<synchronous>, transform_indices = @transform_1, window_bounds = array<i64: 32, 32>}, {pipeline_mode = #tpu.pipeline_mode<synchronous>, transform_indices = @transform_2, window_bounds = array<i64: 32, 1>}, {pipeline_mode = #tpu.pipeline_mode<synchronous>, transform_indices = @transform_3, window_bounds = array<i64: 32, 1>}, {pipeline_mode = #tpu.pipeline_mode<synchronous>, transform_indices = @transform_4, window_bounds = array<i64: 1, 1>}, {pipeline_mode = #tpu.pipeline_mode<synchronous>, transform_indices = @transform_5, window_bounds = array<i64: 8, 1>}, {pipeline_mode = #tpu.pipeline_mode<synchronous>, transform_indices = @transform_6, window_bounds = array<i64: 8, 1>}, {pipeline_mode = #tpu.pipeline_mode<synchronous>, transform_indices = @transform_7, window_bounds = array<i64: 8, 1>}, {pipeline_mode = #tpu.pipeline_mode<synchronous>, transform_indices = @transform_8, window_bounds = array<i64: 1, 1>}]} {
    %c0_i32 = arith.constant 0 : i32
    %0 = arith.cmpi eq, %arg0, %c0_i32 : i32
    %1 = arith.extui %0 : i1 to i32
    %c0_i32_0 = arith.constant 0 : i32
    %2 = arith.cmpi ne, %1, %c0_i32_0 : i32
    scf.if %2 {
      %cst_31 = arith.constant -1.000000e+30 : f32
      %54 = vector.broadcast %cst_31 : f32 to vector<1x1xf32>
      %c0_32 = arith.constant 0 : index
      %c0_33 = arith.constant 0 : index
      %55 = vector.load %arg10[%c0_32, %c0_33] : memref<1x1xf32, #tpu.memory_space<vmem>>, vector<1x1xf32>
      tpu.vector_store %arg10[%c0_32, %c0_33], %54 {strides = array<i32>} : memref<1x1xf32, #tpu.memory_space<vmem>>, vector<1x1xf32>,
      %cst_34 = arith.constant 0.000000e+00 : f32
      %56 = vector.broadcast %cst_34 : f32 to vector<1x1xf32>
      %c0_35 = arith.constant 0 : index
      %c0_36 = arith.constant 0 : index
      %57 = vector.load %arg11[%c0_35, %c0_36] : memref<1x1xf32, #tpu.memory_space<vmem>>, vector<1x1xf32>
      tpu.vector_store %arg11[%c0_35, %c0_36], %56 {strides = array<i32>} : memref<1x1xf32, #tpu.memory_space<vmem>>, vector<1x1xf32>,
      %cst_37 = arith.constant 0.000000e+00 : f32
      %58 = vector.broadcast %cst_37 : f32 to vector<8x1xf32>
      %c0_38 = arith.constant 0 : index
      %c0_39 = arith.constant 0 : index
      %59 = vector.load %arg12[%c0_38, %c0_39] : memref<8x1xf32, #tpu.memory_space<vmem>>, vector<8x1xf32>
      tpu.vector_store %arg12[%c0_38, %c0_39], %58 {strides = array<i32>} : memref<8x1xf32, #tpu.memory_space<vmem>>, vector<8x1xf32>,
    } else {
    }
    %c0 = arith.constant 0 : index
    %c0_1 = arith.constant 0 : index
    %3 = vector.load %arg1[%c0, %c0_1] : memref<512x32xf32, #tpu.memory_space<vmem>>, vector<512x32xf32>
    %4 = arith.truncf %3 : vector<512x32xf32> to vector<512x32xbf16>
    %c0_2 = arith.constant 0 : index
    %c0_3 = arith.constant 0 : index
    %5 = vector.load %arg2[%c0_2, %c0_3] : memref<32x32xbf16, #tpu.memory_space<vmem>>, vector<32x32xbf16>
    %cst = arith.constant dense<0.000000e+00> : vector<32x512xf32>
    %6 = tpu.matmul %5, %4, %cst {dimension_numbers = #tpu.dot_dimension_numbers<[1], [1], [0], [0], [0, 0, 1, 0], [], []>} : vector<32x32xbf16>, vector<512x32xbf16>, vector<32x512xf32> -> vector<32x512xf32>
    %c0_4 = arith.constant 0 : index
    %c0_5 = arith.constant 0 : index
    %7 = vector.load %arg3[%c0_4, %c0_5] : memref<32x1xf32, #tpu.memory_space<vmem>>, vector<32x1xf32>
    %8 = vector.broadcast %7 : vector<32x1xf32> to vector<32x512xf32>
    %9 = arith.addf %6, %8 : vector<32x512xf32>
    %10 = math.tanh %9 : vector<32x512xf32>
    %c0_6 = arith.constant 0 : index
    %c0_7 = arith.constant 0 : index
    %11 = vector.load %arg4[%c0_6, %c0_7] : memref<32x1xf32, #tpu.memory_space<vmem>>, vector<32x1xf32>
    %12 = vector.broadcast %11 : vector<32x1xf32> to vector<32x512xf32>
    %13 = arith.mulf %10, %12 : vector<32x512xf32>
    %cst_8 = arith.constant dense<0.000000e+00> : vector<512xf32>
    %14 = vector.multi_reduction <add>, %13, %cst_8 [0] : vector<32x512xf32> to vector<512xf32>
    %15 = vector.shape_cast %14 : vector<512xf32> to vector<1x512xf32>
    %c0_9 = arith.constant 0 : index
    %c0_10 = arith.constant 0 : index
    %16 = vector.load %arg5[%c0_9, %c0_10] : memref<1x1xf32, #tpu.memory_space<vmem>>, vector<1x1xf32>
    %17 = vector.broadcast %16 : vector<1x1xf32> to vector<1x512xf32>
    %18 = arith.addf %15, %17 : vector<1x512xf32>
    %c0_11 = arith.constant 0 : index
    %c0_12 = arith.constant 0 : index
    %19 = vector.load %arg10[%c0_11, %c0_12] : memref<1x1xf32, #tpu.memory_space<vmem>>, vector<1x1xf32>
    %cst_13 = arith.constant dense<0xFF800000> : vector<1xf32>
    %20 = vector.multi_reduction <maximumf>, %18, %cst_13 [1] : vector<1x512xf32> to vector<1xf32>
    %21 = vector.shape_cast %20 : vector<1xf32> to vector<1x1xf32>
    %22 = arith.maximumf %19, %21 : vector<1x1xf32>
    %c0_14 = arith.constant 0 : index
    %c0_15 = arith.constant 0 : index
    %23 = vector.load %arg11[%c0_14, %c0_15] : memref<1x1xf32, #tpu.memory_space<vmem>>, vector<1x1xf32>
    %24 = arith.subf %19, %22 : vector<1x1xf32>
    %25 = math.exp %24 : vector<1x1xf32>
    %26 = arith.mulf %23, %25 : vector<1x1xf32>
    %27 = vector.broadcast %22 : vector<1x1xf32> to vector<1x512xf32>
    %28 = arith.subf %18, %27 : vector<1x512xf32>
    %29 = math.exp %28 : vector<1x512xf32>
    %cst_16 = arith.constant dense<0.000000e+00> : vector<1xf32>
    %30 = vector.multi_reduction <add>, %29, %cst_16 [1] : vector<1x512xf32> to vector<1xf32>
    %31 = vector.shape_cast %30 : vector<1xf32> to vector<1x1xf32>
    %32 = arith.addf %26, %31 : vector<1x1xf32>
    %c0_17 = arith.constant 0 : index
    %c0_18 = arith.constant 0 : index
    %33 = vector.load %arg11[%c0_17, %c0_18] : memref<1x1xf32, #tpu.memory_space<vmem>>, vector<1x1xf32>
    tpu.vector_store %arg11[%c0_17, %c0_18], %32 {strides = array<i32>} : memref<1x1xf32, #tpu.memory_space<vmem>>, vector<1x1xf32>,
    %c0_19 = arith.constant 0 : index
    %c0_20 = arith.constant 0 : index
    %34 = vector.load %arg10[%c0_19, %c0_20] : memref<1x1xf32, #tpu.memory_space<vmem>>, vector<1x1xf32>
    tpu.vector_store %arg10[%c0_19, %c0_20], %22 {strides = array<i32>} : memref<1x1xf32, #tpu.memory_space<vmem>>, vector<1x1xf32>,
    %35 = tpu.iota {dimensions = array<i32: 1>} : vector<8x512xi32>
    %c512_i32 = arith.constant 512 : i32
    %36 = arith.muli %arg0, %c512_i32 : i32
    %37 = vector.broadcast %36 : i32 to vector<8x512xi32>
    %38 = arith.addi %35, %37 : vector<8x512xi32>
    %c0_21 = arith.constant 0 : index
    %c0_22 = arith.constant 0 : index
    %39 = vector.load %arg6[%c0_21, %c0_22] : memref<8x1xi32, #tpu.memory_space<vmem>>, vector<8x1xi32>
    %40 = vector.broadcast %39 : vector<8x1xi32> to vector<8x512xi32>
    %41 = arith.cmpi eq, %38, %40 : vector<8x512xi32>
    %c0_23 = arith.constant 0 : index
    %c0_24 = arith.constant 0 : index
    %42 = vector.load %arg12[%c0_23, %c0_24] : memref<8x1xf32, #tpu.memory_space<vmem>>, vector<8x1xf32>
    %cst_25 = arith.constant 0.000000e+00 : f32
    %43 = vector.shape_cast %18 : vector<1x512xf32> to vector<1x512xf32>
    %44 = vector.broadcast %43 : vector<1x512xf32> to vector<8x512xf32>
    %45 = vector.broadcast %cst_25 : f32 to vector<8x512xf32>
    %46 = arith.select %41, %44, %45 : vector<8x512xi1>, vector<8x512xf32>
    %cst_26 = arith.constant dense<0.000000e+00> : vector<8xf32>
    %47 = vector.multi_reduction <add>, %46, %cst_26 [1] : vector<8x512xf32> to vector<8xf32>
    %48 = vector.shape_cast %47 : vector<8xf32> to vector<8x1xf32>
    %49 = arith.addf %42, %48 : vector<8x1xf32>
    %c0_27 = arith.constant 0 : index
    %c0_28 = arith.constant 0 : index
    %50 = vector.load %arg12[%c0_27, %c0_28] : memref<8x1xf32, #tpu.memory_space<vmem>>, vector<8x1xf32>
    tpu.vector_store %arg12[%c0_27, %c0_28], %49 {strides = array<i32>} : memref<8x1xf32, #tpu.memory_space<vmem>>, vector<8x1xf32>,
    %c0_i32_29 = arith.constant 0 : i32
    %51 = arith.cmpi eq, %arg0, %c0_i32_29 : i32
    %52 = arith.extui %51 : i1 to i32
    %c0_i32_30 = arith.constant 0 : i32
    %53 = arith.cmpi ne, %52, %c0_i32_30 : i32
    scf.if %53 {
      %c0_31 = arith.constant 0 : index
      %c0_32 = arith.constant 0 : index
      %54 = vector.load %arg10[%c0_31, %c0_32] : memref<1x1xf32, #tpu.memory_space<vmem>>, vector<1x1xf32>
      %c0_33 = arith.constant 0 : index
      %c0_34 = arith.constant 0 : index
      %55 = vector.load %arg11[%c0_33, %c0_34] : memref<1x1xf32, #tpu.memory_space<vmem>>, vector<1x1xf32>
      %56 = math.log %55 : vector<1x1xf32>
      %57 = arith.addf %54, %56 : vector<1x1xf32>
      %c0_35 = arith.constant 0 : index
      %c0_36 = arith.constant 0 : index
      %58 = vector.load %arg12[%c0_35, %c0_36] : memref<8x1xf32, #tpu.memory_space<vmem>>, vector<8x1xf32>
      %59 = vector.broadcast %57 : vector<1x1xf32> to vector<8x1xf32>
      %60 = arith.subf %58, %59 : vector<8x1xf32>
      %cst_37 = arith.constant -18.420681 : f32
      %61 = vector.broadcast %cst_37 : f32 to vector<8x1xf32>
      %62 = arith.maximumf %60, %61 : vector<8x1xf32>
      %c0_38 = arith.constant 0 : index
      %c0_39 = arith.constant 0 : index
      %63 = vector.load %arg7[%c0_38, %c0_39] : memref<8x1xf32, #tpu.memory_space<vmem>>, vector<8x1xf32>
      %64 = arith.mulf %62, %63 : vector<8x1xf32>
      %c0_40 = arith.constant 0 : index
      %c0_41 = arith.constant 0 : index
      %65 = vector.load %arg8[%c0_40, %c0_41] : memref<8x1xf32, #tpu.memory_space<vmem>>, vector<8x1xf32>
      %66 = arith.mulf %64, %65 : vector<8x1xf32>
      %cst_42 = arith.constant dense<0.000000e+00> : vector<1xf32>
      %67 = vector.multi_reduction <add>, %66, %cst_42 [0] : vector<8x1xf32> to vector<1xf32>
      %68 = vector.shape_cast %67 : vector<1xf32> to vector<1x1xf32>
      %cst_43 = arith.constant 8.000000e+00 : f32
      %69 = vector.broadcast %cst_43 : f32 to vector<1x1xf32>
      %70 = arith.divf %68, %69 : vector<1x1xf32>
      %cst_44 = arith.constant 0.000000e+00 : f32
      %71 = vector.broadcast %cst_44 : f32 to vector<1x1xf32>
      %72 = arith.subf %71, %70 : vector<1x1xf32>
      %c0_45 = arith.constant 0 : index
      %c0_46 = arith.constant 0 : index
      %73 = vector.load %arg9[%c0_45, %c0_46] : memref<1x1xf32, #tpu.memory_space<vmem>>, vector<1x1xf32>
      tpu.vector_store %arg9[%c0_45, %c0_46], %72 {strides = array<i32>} : memref<1x1xf32, #tpu.memory_space<vmem>>, vector<1x1xf32>,
    } else {
    }
    return
  }
  func.func @transform_0(%arg0: i32) -> (i32, i32) {
    %c0_i32 = arith.constant 0 : i32
    %c0_i32_0 = arith.constant 0 : i32
    return %arg0, %c0_i32 : i32, i32
  }
  func.func @transform_1(%arg0: i32) -> (i32, i32) {
    %c0_i32 = arith.constant 0 : i32
    %c0_i32_0 = arith.constant 0 : i32
    %c0_i32_1 = arith.constant 0 : i32
    return %c0_i32, %c0_i32_0 : i32, i32
  }
  func.func @transform_2(%arg0: i32) -> (i32, i32) {
    %c0_i32 = arith.constant 0 : i32
    %c0_i32_0 = arith.constant 0 : i32
    %c0_i32_1 = arith.constant 0 : i32
    return %c0_i32, %c0_i32_0 : i32, i32
  }
  func.func @transform_3(%arg0: i32) -> (i32, i32) {
    %c0_i32 = arith.constant 0 : i32
    %c0_i32_0 = arith.constant 0 : i32
    %c0_i32_1 = arith.constant 0 : i32
    return %c0_i32, %c0_i32_0 : i32, i32
  }
  func.func @transform_4(%arg0: i32) -> (i32, i32) {
    %c0_i32 = arith.constant 0 : i32
    %c0_i32_0 = arith.constant 0 : i32
    %c0_i32_1 = arith.constant 0 : i32
    return %c0_i32, %c0_i32_0 : i32, i32
  }
  func.func @transform_5(%arg0: i32) -> (i32, i32) {
    %c0_i32 = arith.constant 0 : i32
    %c0_i32_0 = arith.constant 0 : i32
    %c0_i32_1 = arith.constant 0 : i32
    return %c0_i32, %c0_i32_0 : i32, i32
  }
  func.func @transform_6(%arg0: i32) -> (i32, i32) {
    %c0_i32 = arith.constant 0 : i32
    %c0_i32_0 = arith.constant 0 : i32
    %c0_i32_1 = arith.constant 0 : i32
    return %c0_i32, %c0_i32_0 : i32, i32
  }
  func.func @transform_7(%arg0: i32) -> (i32, i32) {
    %c0_i32 = arith.constant 0 : i32
    %c0_i32_0 = arith.constant 0 : i32
    %c0_i32_1 = arith.constant 0 : i32
    return %c0_i32, %c0_i32_0 : i32, i32
  }
  func.func @transform_8(%arg0: i32) -> (i32, i32) {
    %c0_i32 = arith.constant 0 : i32
    %c0_i32_0 = arith.constant 0 : i32
    %c0_i32_1 = arith.constant 0 : i32
    return %c0_i32, %c0_i32_0 : i32, i32
  }
}

</mosaic_0001>

<llo_original>
// kernel: tpu_custom_call.1
$region0: #{tpu_custom_call.1}
  #allocation0 [shape = 'u32[]', space=smem, size = 0x4, offset = 0x4, fixed_abs, tag = 'smem constant byte address 0x4 - core index']
  #allocation1 [shape = 'u32[144,128]{1,0:T(1,128)}', space=vmem, size = 0x12000, scoped, tag = 'internal scratch']
  #allocation2 [shape = 'f32[1,1]{1,0:T(1,128)}', space=vmem, size = 0x200, scoped, tag = 'scratch operand']
  #allocation3 [shape = 'f32[1,1]{1,0:T(1,128)}', space=vmem, size = 0x200, scoped, tag = 'scratch operand']
  #allocation4 [shape = 'f32[8,1]{1,0:T(8,128)}', space=vmem, size = 0x1000, scoped, tag = 'scratch operand']
  #allocation5 [shape = 'f32[1,1]{1,0:T(1,128)S(1)}', space=vmem, size = 0x200, scoped, tag = 'scoped memory for tpu_custom_call.1']
  %s0 = inlined_call_operand.vmem [shape: f32[512,32], index: 0, kind: input, shape index: {}]
  %s1 = inlined_call_operand.vmem [shape: bf16[32,32], index: 1, kind: input, shape index: {}]
  %s2 = inlined_call_operand.vmem [shape: f32[32,1], index: 2, kind: input, shape index: {}]
  %s3 = inlined_call_operand.vmem [shape: f32[32,1], index: 3, kind: input, shape index: {}]
  %s4 = inlined_call_operand.<no memory space> [shape: f32[1,1], index: 4, kind: input, shape index: {}]
  %s5 = inlined_call_operand.vmem [shape: s32[8,1], index: 5, kind: input, shape index: {}]
  %s6 = inlined_call_operand.vmem [shape: f32[8,1], index: 6, kind: input, shape index: {}]
  %s7 = inlined_call_operand.vmem [shape: f32[8,1], index: 7, kind: input, shape index: {}]
  %s8 = inlined_call_operand.hbm [shape: f32[1,1], index: 8, kind: output, shape index: {}]
  %s9 = sld [smem:[#allocation0]]
  $region50: #{tpu_custom_call.1} parent=0
    _
  %s11 = ssub.s32 1, %s9
  %s12 = scalar_select 0, %s11, %s9
  %v13 = vstv %s4
  %14 = vst [vmem:[#allocation5] sm:$0x1] %v13
  $region1: #{tpu_custom_call.1} parent=0
    #allocation6 [shape = 'u8[512]{0}', space=vmem, size = 0x400, scoped, tag = 'output window, operand 0, single buffered']
    #allocation7 [shape = 's32[1]{0}', space=sflag, size = 0x4, scoped, tag = 'scoped memory for tpu_custom_call.1']
    %15 = vsyncpa [#allocation7], 0
    // Predicated region
    $region2: #{tpu_custom_call.1} parent=1 // pred_check
      _
    $region3: #{tpu_custom_call.1} parent=1 // pred_check_branch
      %17 = sbr.rel (0) target = $region5
    $region4: #{tpu_custom_call.1} parent=1 // pred_region
      _
    $region5: #{tpu_custom_call.1} parent=1 // pred_fallthru
      _
    // Predicated region
    $region6: #{tpu_custom_call.1} parent=1 // pred_check
      _
    $region7: #{tpu_custom_call.1} parent=1 // pred_check_branch
      %19 = sbr.rel (0) target = $region9
    $region8: #{tpu_custom_call.1} parent=1 // pred_region
      _
    $region9: #{tpu_custom_call.1} parent=1 // pred_fallthru
      _
    // Predicated region
    $region10: #{tpu_custom_call.1} parent=1 // pred_check
      _
    $region11: #{tpu_custom_call.1} parent=1 // pred_check_branch
      %21 = sbr.rel (0) target = $region13
    $region12: #{tpu_custom_call.1} parent=1 // pred_region
      _
    $region13: #{tpu_custom_call.1} parent=1 // pred_fallthru
      _
    // Predicated region
    $region14: #{tpu_custom_call.1} parent=1 // pred_check
      _
    $region15: #{tpu_custom_call.1} parent=1 // pred_check_branch
      %23 = sbr.rel (0) target = $region17
    $region16: #{tpu_custom_call.1} parent=1 // pred_region
      _
    $region17: #{tpu_custom_call.1} parent=1 // pred_fallthru
      _
    // Predicated region
    $region18: #{tpu_custom_call.1} parent=1 // pred_check
      _
    $region19: #{tpu_custom_call.1} parent=1 // pred_check_branch
      %25 = sbr.rel (0) target = $region21
    $region20: #{tpu_custom_call.1} parent=1 // pred_region
      _
    $region21: #{tpu_custom_call.1} parent=1 // pred_fallthru
      _
    // Predicated region
    $region22: #{tpu_custom_call.1} parent=1 // pred_check
      _
    $region23: #{tpu_custom_call.1} parent=1 // pred_check_branch
      %27 = sbr.rel (0) target = $region25
    $region24: #{tpu_custom_call.1} parent=1 // pred_region
      _
    $region25: #{tpu_custom_call.1} parent=1 // pred_fallthru
      _
    // Predicated region
    $region26: #{tpu_custom_call.1} parent=1 // pred_check
      _
    $region27: #{tpu_custom_call.1} parent=1 // pred_check_branch
      %29 = sbr.rel (0) target = $region29
    $region28: #{tpu_custom_call.1} parent=1 // pred_region
      _
    $region29: #{tpu_custom_call.1} parent=1 // pred_fallthru
      _
    // Predicated region
    $region30: #{tpu_custom_call.1} parent=1 // pred_check
      _
    $region31: #{tpu_custom_call.1} parent=1 // pred_check_branch
      %31 = sbr.rel (0) target = $region33
    $region32: #{tpu_custom_call.1} parent=1 // pred_region
      _
    $region33: #{tpu_custom_call.1} parent=1 // pred_fallthru
      _
    %p33 = scmp.eq.s32.totalorder 0, 0
    // Predicated region
    $region34: #{tpu_custom_call.1} parent=1 // pred_check
      %p34 = pneg %p33
    $region35: #{tpu_custom_call.1} parent=1 // pred_check_branch
      %36 = sbr.rel (%p34) target = $region37
    $region36: #{tpu_custom_call.1} parent=1 // pred_region
      %vm37 = vcmask 0
      %38 = vst.msk [vmem:[#allocation2] sm:$0x1] %vm37, -1e+30
      %39 = vst.msk [vmem:[#allocation3] sm:$0x1] %vm37, 0.0
      %vm40 = vcmask 7168
      %41 = vst.msk [vmem:[#allocation4] sm:$0xff] %vm40, 0.0
    $region37: #{tpu_custom_call.1} parent=1 // pred_fallthru
      _
    %v42 = vld [vmem:[%s0] sm:$0xff]
    %v43 = vld [vmem:[%s0 + $0x8] sm:$0xff]
    %v44 = vld [vmem:[%s0 + $0x10] sm:$0xff]
    %v45 = vld [vmem:[%s0 + $0x18] sm:$0xff]
    %v46 = vld [vmem:[%s0 + $0x20] sm:$0xff]
    %v47 = vld [vmem:[%s0 + $0x28] sm:$0xff]
    %v48 = vld [vmem:[%s0 + $0x30] sm:$0xff]
    %v49 = vld [vmem:[%s0 + $0x38] sm:$0xff]
    %v50 = vld [vmem:[%s0 + $0x40] sm:$0xff]
    %v51 = vld [vmem:[%s0 + $0x48] sm:$0xff]
    %v52 = vld [vmem:[%s0 + $0x50] sm:$0xff]
    %v53 = vld [vmem:[%s0 + $0x58] sm:$0xff]
    %v54 = vld [vmem:[%s0 + $0x60] sm:$0xff]
    %v55 = vld [vmem:[%s0 + $0x68] sm:$0xff]
    %v56 = vld [vmem:[%s0 + $0x70] sm:$0xff]
    %v57 = vld [vmem:[%s0 + $0x78] sm:$0xff]
    %v58 = vld [vmem:[%s0 + $0x80] sm:$0xff]
    %v59 = vld [vmem:[%s0 + $0x88] sm:$0xff]
    %v60 = vld [vmem:[%s0 + $0x90] sm:$0xff]
    %v61 = vld [vmem:[%s0 + $0x98] sm:$0xff]
    %v62 = vld [vmem:[%s0 + $0xa0] sm:$0xff]
    %v63 = vld [vmem:[%s0 + $0xa8] sm:$0xff]
    %v64 = vld [vmem:[%s0 + $0xb0] sm:$0xff]
    %v65 = vld [vmem:[%s0 + $0xb8] sm:$0xff]
    %v66 = vld [vmem:[%s0 + $0xc0] sm:$0xff]
    %v67 = vld [vmem:[%s0 + $0xc8] sm:$0xff]
    %v68 = vld [vmem:[%s0 + $0xd0] sm:$0xff]
    %v69 = vld [vmem:[%s0 + $0xd8] sm:$0xff]
    %v70 = vld [vmem:[%s0 + $0xe0] sm:$0xff]
    %v71 = vld [vmem:[%s0 + $0xe8] sm:$0xff]
    %v72 = vld [vmem:[%s0 + $0xf0] sm:$0xff]
    %v73 = vld [vmem:[%s0 + $0xf8] sm:$0xff]
    %v74 = vld [vmem:[%s0 + $0x100] sm:$0xff]
    %v75 = vld [vmem:[%s0 + $0x108] sm:$0xff]
    %v76 = vld [vmem:[%s0 + $0x110] sm:$0xff]
    %v77 = vld [vmem:[%s0 + $0x118] sm:$0xff]
    %v78 = vld [vmem:[%s0 + $0x120] sm:$0xff]
    %v79 = vld [vmem:[%s0 + $0x128] sm:$0xff]
    %v80 = vld [vmem:[%s0 + $0x130] sm:$0xff]
    %v81 = vld [vmem:[%s0 + $0x138] sm:$0xff]
    %v82 = vld [vmem:[%s0 + $0x140] sm:$0xff]
    %v83 = vld [vmem:[%s0 + $0x148] sm:$0xff]
    %v84 = vld [vmem:[%s0 + $0x150] sm:$0xff]
    %v85 = vld [vmem:[%s0 + $0x158] sm:$0xff]
    %v86 = vld [vmem:[%s0 + $0x160] sm:$0xff]
    %v87 = vld [vmem:[%s0 + $0x168] sm:$0xff]
    %v88 = vld [vmem:[%s0 + $0x170] sm:$0xff]
    %v89 = vld [vmem:[%s0 + $0x178] sm:$0xff]
    %v90 = vld [vmem:[%s0 + $0x180] sm:$0xff]
    %v91 = vld [vmem:[%s0 + $0x188] sm:$0xff]
    %v92 = vld [vmem:[%s0 + $0x190] sm:$0xff]
    %v93 = vld [vmem:[%s0 + $0x198] sm:$0xff]
    %v94 = vld [vmem:[%s0 + $0x1a0] sm:$0xff]
    %v95 = vld [vmem:[%s0 + $0x1a8] sm:$0xff]
    %v96 = vld [vmem:[%s0 + $0x1b0] sm:$0xff]
    %v97 = vld [vmem:[%s0 + $0x1b8] sm:$0xff]
    %v98 = vld [vmem:[%s0 + $0x1c0] sm:$0xff]
    %v99 = vld [vmem:[%s0 + $0x1c8] sm:$0xff]
    %v100 = vld [vmem:[%s0 + $0x1d0] sm:$0xff]
    %v101 = vld [vmem:[%s0 + $0x1d8] sm:$0xff]
    %v102 = vld [vmem:[%s0 + $0x1e0] sm:$0xff]
    %v103 = vld [vmem:[%s0 + $0x1e8] sm:$0xff]
    %v104 = vld [vmem:[%s0 + $0x1f0] sm:$0xff]
    %v105 = vld [vmem:[%s0 + $0x1f8] sm:$0xff]
    %v106 = vpack.c.bf16 %v43, %v42
    %v107 = vpack.c.bf16 %v45, %v44
    %v108 = vpack.c.bf16 %v47, %v46
    %v109 = vpack.c.bf16 %v49, %v48
    %v110 = vpack.c.bf16 %v51, %v50
    %v111 = vpack.c.bf16 %v53, %v52
    %v112 = vpack.c.bf16 %v55, %v54
    %v113 = vpack.c.bf16 %v57, %v56
    %v114 = vpack.c.bf16 %v59, %v58
    %v115 = vpack.c.bf16 %v61, %v60
    %v116 = vpack.c.bf16 %v63, %v62
    %v117 = vpack.c.bf16 %v65, %v64
    %v118 = vpack.c.bf16 %v67, %v66
    %v119 = vpack.c.bf16 %v69, %v68
    %v120 = vpack.c.bf16 %v71, %v70
    %v121 = vpack.c.bf16 %v73, %v72
    %v122 = vpack.c.bf16 %v75, %v74
    %v123 = vpack.c.bf16 %v77, %v76
    %v124 = vpack.c.bf16 %v79, %v78
    %v125 = vpack.c.bf16 %v81, %v80
    %v126 = vpack.c.bf16 %v83, %v82
    %v127 = vpack.c.bf16 %v85, %v84
    %v128 = vpack.c.bf16 %v87, %v86
    %v129 = vpack.c.bf16 %v89, %v88
    %v130 = vpack.c.bf16 %v91, %v90
    %v131 = vpack.c.bf16 %v93, %v92
    %v132 = vpack.c.bf16 %v95, %v94
    %v133 = vpack.c.bf16 %v97, %v96
    %v134 = vpack.c.bf16 %v99, %v98
    %v135 = vpack.c.bf16 %v101, %v100
    %v136 = vpack.c.bf16 %v103, %v102
    %v137 = vpack.c.bf16 %v105, %v104
    %v138 = vld [vmem:[%s1] sm:$0xf]
    %v139 = vld [vmem:[%s1 + $0x4] sm:$0xf]
    %v140 = vld [vmem:[%s1 + $0x8] sm:$0xf]
    %v141 = vld [vmem:[%s1 + $0xc] sm:$0xf]
    %v142 = vld [vmem:[%s2] sm:$0xff]
    %v143 = vld [vmem:[%s2 + $0x8] sm:$0xff]
    %v144 = vld [vmem:[%s2 + $0x10] sm:$0xff]
    %v145 = vld [vmem:[%s2 + $0x18] sm:$0xff]
    %147 = vset.pattern.permute.xlu0 0
    %148 = vperm.xlu0 %147, %v142
    %v149 = vpop.permute.xlu0 %148
    %152 = vset.pattern.permute.xlu0 0
    %153 = vperm.xlu0 %152, %v143
    %v154 = vpop.permute.xlu0 %153
    %157 = vset.pattern.permute.xlu0 0
    %158 = vperm.xlu0 %157, %v144
    %v159 = vpop.permute.xlu0 %158
    %162 = vset.pattern.permute.xlu0 0
    %163 = vperm.xlu0 %162, %v145
    %v164 = vpop.permute.xlu0 %163
    %v170 = vunpack.c.l.b16 %v138
    %v171 = vunpack.c.l.b16 %v139
    %v172 = vunpack.c.l.b16 %v140
    %v173 = vunpack.c.l.b16 %v141
    %v174 = vpack.c.b16 %v171, %v170
    %v175 = vpack.c.b16 %v173, %v172
    %vm176 = vcmask 261120
    %v178 = vsel %vm176, %v174, 0
    %v181 = vsel %vm176, %v175, 0
    %v184 = vsel %vm176, %v106, 0
    %v187 = vsel %vm176, %v107, 0
    %v190 = vsel %vm176, %v108, 0
    %v193 = vsel %vm176, %v109, 0
    %v196 = vsel %vm176, %v110, 0
    %v199 = vsel %vm176, %v111, 0
    %v202 = vsel %vm176, %v112, 0
    %v205 = vsel %vm176, %v113, 0
    %v208 = vsel %vm176, %v114, 0
    %v211 = vsel %vm176, %v115, 0
    %v214 = vsel %vm176, %v116, 0
    %v217 = vsel %vm176, %v117, 0
    %v220 = vsel %vm176, %v118, 0
    %v223 = vsel %vm176, %v119, 0
    %v226 = vsel %vm176, %v120, 0
    %v229 = vsel %vm176, %v121, 0
    %v232 = vsel %vm176, %v122, 0
    %v235 = vsel %vm176, %v123, 0
    %v238 = vsel %vm176, %v124, 0
    %v241 = vsel %vm176, %v125, 0
    %v244 = vsel %vm176, %v126, 0
    %v247 = vsel %vm176, %v127, 0
    %v250 = vsel %vm176, %v128, 0
    %v253 = vsel %vm176, %v129, 0
    %v256 = vsel %vm176, %v130, 0
    %v259 = vsel %vm176, %v131, 0
    %v262 = vsel %vm176, %v132, 0
    %v265 = vsel %vm176, %v133, 0
    %v268 = vsel %vm176, %v134, 0
    %v271 = vsel %vm176, %v135, 0
    %v274 = vsel %vm176, %v136, 0
    %v277 = vsel %vm176, %v137, 0
    %279 = vmatprep.subr.bf16.mxu0 0
    %280 = vmatpush1.bf16.xpose.msra.mxu0 %v184
    %281 = vmatprep.subr.bf16.mxu0 0
    %282 = vmatpush1.bf16.xpose.msra.mxu0 %v187
    %283 = vmatprep.subr.bf16.mxu0 0
    %284 = vmatpush1.bf16.xpose.msra.mxu0 %v190
    %285 = vmatprep.subr.bf16.mxu0 0
    %286 = vmatpush1.bf16.xpose.msra.mxu0 %v193
    %287 = vmatprep.subr.bf16.mxu0 0
    %288 = vmatpush1.bf16.xpose.msra.mxu0 %v196
    %289 = vmatprep.subr.bf16.mxu0 0
    %290 = vmatpush1.bf16.xpose.msra.mxu0 %v199
    %291 = vmatprep.subr.bf16.mxu0 0
    %292 = vmatpush1.bf16.xpose.msra.mxu0 %v202
    %293 = vmatprep.subr.bf16.mxu0 0
    %294 = vmatpush1.bf16.xpose.msra.mxu0 %v205
    %295 = vmatprep.subr.bf16.mxu0 0
    %296 = vmatpush1.bf16.xpose.msra.mxu0 %v208
    %297 = vmatprep.subr.bf16.mxu0 0
    %298 = vmatpush1.bf16.xpose.msra.mxu0 %v211
    %299 = vmatprep.subr.bf16.mxu0 0
    %300 = vmatpush1.bf16.xpose.msra.mxu0 %v214
    %301 = vmatprep.subr.bf16.mxu0 0
    %302 = vmatpush1.bf16.xpose.msra.mxu0 %v217
    %303 = vmatprep.subr.bf16.mxu0 0
    %304 = vmatpush1.bf16.xpose.msra.mxu0 %v220
    %305 = vmatprep.subr.bf16.mxu0 0
    %306 = vmatpush1.bf16.xpose.msra.mxu0 %v223
    %307 = vmatprep.subr.bf16.mxu0 0
    %308 = vmatpush1.bf16.xpose.msra.mxu0 %v226
    %309 = vmatprep.subr.bf16.mxu0 0
    %310 = vmatpush1.bf16.xpose.msra.mxu0 %v229
    %311 = vmatprep.mubr.bf16.mxu0 0
    %312 = vmatmul.mubr.bf16.gmra.mrb[0].mxu0 %v178
    %v313 = vpop.f32.mrb[0].mxu0
    %v314 = vadd.f32 %v149, %v313
    %v315 = vpop.f32.mrb[0].mxu0
    %v316 = vadd.f32 %v149, %v315
    %v317 = vpop.f32.mrb[0].mxu0
    %v318 = vadd.f32 %v154, %v317
    %v319 = vpop.f32.mrb[0].mxu0
    %v320 = vadd.f32 %v154, %v319
    %321 = vmatprep.mubr.bf16.mxu0 0
    %322 = vmatmul.mubr.bf16.gmra.mrb[0].mxu0 %v181
    %v323 = vpop.f32.mrb[0].mxu0
    %v324 = vadd.f32 %v159, %v323
    %v325 = vpop.f32.mrb[0].mxu0
    %v326 = vadd.f32 %v159, %v325
    %v327 = vpop.f32.mrb[0].mxu0
    %v328 = vadd.f32 %v164, %v327
    %v329 = vpop.f32.mrb[0].mxu0
    %v330 = vadd.f32 %v164, %v329
    %331 = vdwg.mxu0
    %332 = vmatprep.subr.bf16.mxu0 0
    %333 = vmatpush1.bf16.xpose.msra.mxu0 %v232
    %334 = vmatprep.subr.bf16.mxu0 0
    %335 = vmatpush1.bf16.xpose.msra.mxu0 %v235
    %336 = vmatprep.subr.bf16.mxu0 0
    %337 = vmatpush1.bf16.xpose.msra.mxu0 %v238
    %338 = vmatprep.subr.bf16.mxu0 0
    %339 = vmatpush1.bf16.xpose.msra.mxu0 %v241
    %340 = vmatprep.subr.bf16.mxu0 0
    %341 = vmatpush1.bf16.xpose.msra.mxu0 %v244
    %342 = vmatprep.subr.bf16.mxu0 0
    %343 = vmatpush1.bf16.xpose.msra.mxu0 %v247
    %344 = vmatprep.subr.bf16.mxu0 0
    %345 = vmatpush1.bf16.xpose.msra.mxu0 %v250
    %346 = vmatprep.subr.bf16.mxu0 0
    %347 = vmatpush1.bf16.xpose.msra.mxu0 %v253
    %348 = vmatprep.subr.bf16.mxu0 0
    %349 = vmatpush1.bf16.xpose.msra.mxu0 %v256
    %350 = vmatprep.subr.bf16.mxu0 0
    %351 = vmatpush1.bf16.xpose.msra.mxu0 %v259
    %352 = vmatprep.subr.bf16.mxu0 0
    %353 = vmatpush1.bf16.xpose.msra.mxu0 %v262
    %354 = vmatprep.subr.bf16.mxu0 0
    %355 = vmatpush1.bf16.xpose.msra.mxu0 %v265
    %356 = vmatprep.subr.bf16.mxu0 0
    %357 = vmatpush1.bf16.xpose.msra.mxu0 %v268
    %358 = vmatprep.subr.bf16.mxu0 0
    %359 = vmatpush1.bf16.xpose.msra.mxu0 %v271
    %360 = vmatprep.subr.bf16.mxu0 0
    %361 = vmatpush1.bf16.xpose.msra.mxu0 %v274
    %362 = vmatprep.subr.bf16.mxu0 0
    %363 = vmatpush1.bf16.xpose.msra.mxu0 %v277
    %364 = vmatprep.mubr.bf16.mxu0 0
    %365 = vmatmul.mubr.bf16.gmra.mrb[0].mxu0 %v178
    %v366 = vpop.f32.mrb[0].mxu0
    %v367 = vadd.f32 %v149, %v366
    %v368 = vpop.f32.mrb[0].mxu0
    %v369 = vadd.f32 %v149, %v368
    %v370 = vpop.f32.mrb[0].mxu0
    %v371 = vadd.f32 %v154, %v370
    %v372 = vpop.f32.mrb[0].mxu0
    %v373 = vadd.f32 %v154, %v372
    %374 = vmatprep.mubr.bf16.mxu0 0
    %375 = vmatmul.mubr.bf16.gmra.mrb[0].mxu0 %v181
    %v376 = vpop.f32.mrb[0].mxu0
    %v377 = vadd.f32 %v159, %v376
    %v378 = vpop.f32.mrb[0].mxu0
    %v379 = vadd.f32 %v159, %v378
    %v380 = vpop.f32.mrb[0].mxu0
    %v381 = vadd.f32 %v164, %v380
    %v382 = vpop.f32.mrb[0].mxu0
    %v383 = vadd.f32 %v164, %v382
    %384 = vdwg.mxu0
    %v385 = vtanh.pop %v314
    %v386 = vtanh.pop %v316
    %v387 = vtanh.pop %v367
    %v388 = vtanh.pop %v369
    %v389 = vtanh.pop %v318
    %v390 = vtanh.pop %v320
    %v391 = vtanh.pop %v371
    %v392 = vtanh.pop %v373
    %v393 = vtanh.pop %v324
    %v394 = vtanh.pop %v326
    %v395 = vtanh.pop %v377
    %v396 = vtanh.pop %v379
    %v397 = vtanh.pop %v328
    %v398 = vtanh.pop %v330
    %v399 = vtanh.pop %v381
    %v400 = vtanh.pop %v383
    %v401 = vld [vmem:[%s3] sm:$0xff]
    %v402 = vld [vmem:[%s3 + $0x8] sm:$0xff]
    %v403 = vld [vmem:[%s3 + $0x10] sm:$0xff]
    %v404 = vld [vmem:[%s3 + $0x18] sm:$0xff]
    %406 = vset.pattern.permute.xlu0 0
    %407 = vperm.xlu0 %406, %v401
    %v408 = vpop.permute.xlu0 %407
    %411 = vset.pattern.permute.xlu0 0
    %412 = vperm.xlu0 %411, %v402
    %v413 = vpop.permute.xlu0 %412
    %416 = vset.pattern.permute.xlu0 0
    %417 = vperm.xlu0 %416, %v403
    %v418 = vpop.permute.xlu0 %417
    %421 = vset.pattern.permute.xlu0 0
    %422 = vperm.xlu0 %421, %v404
    %v423 = vpop.permute.xlu0 %422
    %v425 = vmul.f32 %v385, %v408
    %v426 = vmul.f32 %v386, %v408
    %v427 = vmul.f32 %v387, %v408
    %v428 = vmul.f32 %v388, %v408
    %v429 = vmul.f32 %v389, %v413
    %v430 = vmul.f32 %v390, %v413
    %v431 = vmul.f32 %v391, %v413
    %v432 = vmul.f32 %v392, %v413
    %v433 = vmul.f32 %v393, %v418
    %v434 = vmul.f32 %v394, %v418
    %v435 = vmul.f32 %v395, %v418
    %v436 = vmul.f32 %v396, %v418
    %v437 = vmul.f32 %v397, %v423
    %v438 = vmul.f32 %v398, %v423
    %v439 = vmul.f32 %v399, %v423
    %v440 = vmul.f32 %v400, %v423
    %v441 = vadd.f32 %v425, %v429
    %v442 = vadd.f32 %v441, %v433
    %v443 = vadd.f32 %v442, %v437
    %v444 = vrot.slane %v443, 4
    %v445 = vadd.f32 %v443, %v444
    %v446 = vrot.slane %v445, 2
    %v447 = vadd.f32 %v445, %v446
    %v448 = vrot.slane %v447, 1
    %v449 = vadd.f32 %v447, %v448
    %v450 = vadd.f32 %v426, %v430
    %v451 = vadd.f32 %v450, %v434
    %v452 = vadd.f32 %v451, %v438
    %v453 = vrot.slane %v452, 4
    %v454 = vadd.f32 %v452, %v453
    %v455 = vrot.slane %v454, 2
    %v456 = vadd.f32 %v454, %v455
    %v457 = vrot.slane %v456, 1
    %v458 = vadd.f32 %v456, %v457
    %v459 = vadd.f32 %v427, %v431
    %v460 = vadd.f32 %v459, %v435
    %v461 = vadd.f32 %v460, %v439
    %v462 = vrot.slane %v461, 4
    %v463 = vadd.f32 %v461, %v462
    %v464 = vrot.slane %v463, 2
    %v465 = vadd.f32 %v463, %v464
    %v466 = vrot.slane %v465, 1
    %v467 = vadd.f32 %v465, %v466
    %v468 = vadd.f32 %v428, %v432
    %v469 = vadd.f32 %v468, %v436
    %v470 = vadd.f32 %v469, %v440
    %v471 = vrot.slane %v470, 4
    %v472 = vadd.f32 %v470, %v471
    %v473 = vrot.slane %v472, 2
    %v474 = vadd.f32 %v472, %v473
    %v475 = vrot.slane %v474, 1
    %v476 = vadd.f32 %v474, %v475
    %v477 = vld [vmem:[#allocation5] sm:$0x1]
    %479 = vset.pattern.permute.xlu0 0
    %480 = vperm.xlu0 %479, %v477
    %v481 = vpop.permute.xlu0 %480
    %v483 = vlaneseq
    %v484 = vshrl.u32 %v483, 7
    %v485 = vsub.s32 0, %v484
    %v486 = vrot.slane %v481, %v485
    %v487 = vadd.f32 %v449, %v486
    %v488 = vadd.f32 %v458, %v486
    %v489 = vadd.f32 %v467, %v486
    %v490 = vadd.f32 %v476, %v486
    %v491 = vld [vmem:[#allocation2] sm:$0x1]
    %v492 = vmax.f32 %v487, %v488
    %v493 = vmax.f32 %v489, %v490
    %v494 = vmax.f32 %v492, %v493
    %495 = vmax.xlane.f32.xlu0 %v494
    %v496 = vpop.xlane.xlu0 %495
    %v497 = vmax.f32 %v491, %v496
    %v498 = vld [vmem:[#allocation3] sm:$0x1]
    %v499 = vsub.f32 %v491, %v497
    %v500 = vmul.f32 %v499, 1.442695
    %v501 = vpow.pop %v500
    %v502 = vmul.f32 %v498, %v501
    %504 = vset.pattern.permute.xlu0 0
    %505 = vperm.xlu0 %504, %v497
    %v506 = vpop.permute.xlu0 %505
    %v508 = vlaneseq
    %v509 = vshrl.u32 %v508, 7
    %v510 = vsub.s32 0, %v509
    %v511 = vrot.slane %v506, %v510
    %v512 = vsub.f32 %v487, %v511
    %v513 = vsub.f32 %v488, %v511
    %v514 = vsub.f32 %v489, %v511
    %v515 = vsub.f32 %v490, %v511
    %v516 = vmul.f32 %v512, 1.442695
    %v517 = vpow.pop %v516
    %v518 = vmul.f32 %v513, 1.442695
    %v519 = vpow.pop %v518
    %v520 = vmul.f32 %v514, 1.442695
    %v521 = vpow.pop %v520
    %v522 = vmul.f32 %v515, 1.442695
    %v523 = vpow.pop %v522
    %v524 = vadd.f32 %v517, %v519
    %v525 = vadd.f32 %v524, %v521
    %v526 = vadd.f32 %v525, %v523
    %527 = vadd.xlane.f32.xlu0 %v526
    %v528 = vpop.xlane.xlu0 %527
    %v529 = vadd.f32 %v502, %v528
    %vm530 = vcmask 0
    %531 = vst.msk [vmem:[#allocation3] sm:$0x1] %vm530, %v529
    %532 = vst.msk [vmem:[#allocation2] sm:$0x1] %vm530, %v497
    %v533 = vlaneseq
    %v534 = vand.u32 %v533, 127
    %v535 = vadd.s32 %v534, 128
    %v536 = vadd.s32 %v534, 256
    %v537 = vadd.s32 %v534, 384
    %s538 = smul.u32 0, 512
    %v539 = vstv %s538
    %v540 = vadd.s32 %v534, %v539
    %v541 = vadd.s32 %v535, %v539
    %v542 = vadd.s32 %v536, %v539
    %v543 = vadd.s32 %v537, %v539
    %v544 = vld [vmem:[%s5] sm:$0xff]
    %545 = vset.pattern.permute.xlu0 0
    %546 = vperm.xlu0 %545, %v544
    %v547 = vpop.permute.xlu0 %546
    %vm548 = vcmp.eq.s32.totalorder %v540, %v547
    %vm549 = vcmp.eq.s32.totalorder %v541, %v547
    %vm550 = vcmp.eq.s32.totalorder %v542, %v547
    %vm551 = vcmp.eq.s32.totalorder %v543, %v547
    %v552 = vld [vmem:[#allocation4] sm:$0xff]
    %v553 = vsel %vm548, %v487, 0.0
    %v554 = vsel %vm549, %v488, 0.0
    %v555 = vsel %vm550, %v489, 0.0
    %v556 = vsel %vm551, %v490, 0.0
    %v557 = vadd.f32 %v553, %v554
    %v558 = vadd.f32 %v557, %v555
    %v559 = vadd.f32 %v558, %v556
    %560 = vadd.xlane.f32.xlu0 %v559
    %v561 = vpop.xlane.xlu0 %560
    %v562 = vadd.f32 %v552, %v561
    %vm563 = vcmask 7168
    %564 = vst.msk [vmem:[#allocation4] sm:$0xff] %vm563, %v562
    // Predicated region
    $region38: #{tpu_custom_call.1} parent=1 // pred_check
      %p565 = pneg %p33
    $region39: #{tpu_custom_call.1} parent=1 // pred_check_branch
      %567 = sbr.rel (%p565) target = $region41
    $region40: #{tpu_custom_call.1} parent=1 // pred_region
      %v568 = vld [vmem:[#allocation2] sm:$0x1]
      %v569 = vld [vmem:[#allocation3] sm:$0x1]
      %v570 = vlog2.pop %v569
      %v571 = vmul.f32 %v570, 0.6931472
      %v572 = vadd.f32 %v568, %v571
      %v573 = vld [vmem:[#allocation4] sm:$0xff]
      %v575 = vlaneseq
      %v576 = vshrl.u32 %v575, 7
      %v577 = vsub.s32 0, %v576
      %v578 = vrot.slane %v572, %v577
      %v580 = vsub.f32 %v573, %v578
      %v581 = vmax.f32 %v580, -18.420681
      %v582 = vld [vmem:[%s6] sm:$0xff]
      %v583 = vmul.f32 %v581, %v582
      %v584 = vld [vmem:[%s7] sm:$0xff]
      %v585 = vmul.f32 %v583, %v584
      %v586 = vsel %vm563, %v585, 0.0
      %v587 = vrot.slane %v586, 4
      %v588 = vadd.f32 %v586, %v587
      %v589 = vrot.slane %v588, 2
      %v590 = vadd.f32 %v588, %v589
      %v591 = vrot.slane %v590, 1
      %v592 = vadd.f32 %v590, %v591
      %v593 = vrcp.pop 8.0
      %v594 = vmul.f32 %v592, %v593
      %v595 = vsub.f32 0.0, %v594
      %596 = vst.msk [vmem:[#allocation6] sm:$0x1] %vm530, %v595
    $region41: #{tpu_custom_call.1} parent=1 // pred_fallthru
      _
    // Predicated region
    $region42: #{tpu_custom_call.1} parent=1 // pred_check
      _
    $region43: #{tpu_custom_call.1} parent=1 // pred_check_branch
      %598 = sbr.rel (0) target = $region45
    $region44: #{tpu_custom_call.1} parent=1 // pred_region
      %s600 = ssub.s32 16, 16
      %601 = vsyncadd [#allocation7], %s600
      %s603 = sshll.u32 [#allocation6], 4
      %s604 = int_to_ptr.vmem [resolvable:$true] %s603
      %606 = dma.vmem_to_hbm [thread:$0]  %s604, 16, %s8, [#allocation7]
    $region45: #{tpu_custom_call.1} parent=1 // pred_fallthru
      _
    // Predicated region
    $region46: #{tpu_custom_call.1} parent=1 // pred_check
      _
    $region47: #{tpu_custom_call.1} parent=1 // pred_check_branch
      %608 = sbr.rel (0) target = $region49
    $region48: #{tpu_custom_call.1} parent=1 // pred_region
      %609 = dma.done [#allocation7], 16
    $region49: #{tpu_custom_call.1} parent=1 // pred_fallthru
      _
    %610 = vsyncpa [#allocation7], 1

</llo_original>
